<compile_context>
chip_gen: v5e
topology: v5e:2x2
jax: 0.10.0
libtpu: 0.0.40
codegen_flags: <defaults>
</compile_context>

<pallas_src>
import functools
import math

import jax
import jax.numpy as jnp
from jax.experimental import pallas as pl
from jax.experimental.pallas import tpu as pltpu


def _pick_tile(n, pref=256):
    for t in (pref, 128, 64, 32, 16, 8):
        if t <= n and n % t == 0:
            return t
    return n


# --------------------------------------------------------------------------
# Kernel 1: fused q/k/v projection + rotary embedding.
#   One packed matmul, RoPE as elementwise FMA on static lane slices, outputs
#   written per kv-group in the layout the attention kernel consumes.
# --------------------------------------------------------------------------
def qkv_rope_kernel(x_ref, w_ref, b_ref, cos_ref, sin_ref,
                    q_ref, k_ref, v_ref, *, num_heads, num_kv_heads, head_dim):
    H, Hkv, D = num_heads, num_kv_heads, head_dim
    half = D // 2
    rep = H // Hkv

    x = x_ref[0]                                                   # (tt, C)
    y = (jnp.dot(x, w_ref[...], preferred_element_type=jnp.float32)
         + b_ref[...])                                             # (tt, Ntot)

    cosv = cos_ref[...]                                            # (tt, half)
    sinv = sin_ref[...]

    def rot_head(col0):
        # Packed weight columns per head are [even | odd], so these are static
        # contiguous lane slices of the fused matmul result.
        e = y[:, col0:col0 + half]
        o = y[:, col0 + half:col0 + D]
        # RoPE exactly as in the reference module (second half is e*sin - o*cos).
        return jnp.concatenate([e * cosv - o * sinv, e * sinv - o * cosv], axis=-1)

    v_base = (H + Hkv) * D
    for g in range(Hkv):                      # static unroll over kv groups
        pieces = [rot_head((g * rep + r) * D) for r in range(rep)]
        q_ref[g, 0] = jnp.concatenate(pieces, axis=-1).astype(q_ref.dtype)
        k_ref[g, 0] = rot_head((H + g) * D).astype(k_ref.dtype)
        v_ref[g, 0] = y[:, v_base + g * D:v_base + (g + 1) * D].astype(v_ref.dtype)


# --------------------------------------------------------------------------
# Kernel 2: causal flash attention, one kv head + its `rep` query heads / step.
# --------------------------------------------------------------------------
def mqa_flash_kernel(q_ref, k_ref, v_ref, o_ref, m_sc, l_sc, acc_sc,
                     *, scale, rep, head_dim):
    D = head_dim
    qi = pl.program_id(2)
    ki = pl.program_id(3)
    tq = q_ref.shape[2]
    tk = k_ref.shape[2]

    @pl.when(ki == 0)
    def _init():
        m_sc[...] = jnp.full_like(m_sc, -1e30)
        l_sc[...] = jnp.zeros_like(l_sc)
        acc_sc[...] = jnp.zeros_like(acc_sc)

    def process(masked):
        qall = q_ref[0, 0]                                   # (tq, rep*D)
        k = k_ref[0, 0]                                      # (tk, D)
        v = v_ref[0, 0]                                      # (tk, D)
        if masked:                                           # only on the diagonal block
            row = jax.lax.broadcasted_iota(jnp.int32, (tq, tk), 0)
            col = jax.lax.broadcasted_iota(jnp.int32, (tq, tk), 1)
            keep = row >= col                                # tq == tk by construction
        for r in range(rep):                                 # static unroll over q heads
            qh = qall[:, r * D:(r + 1) * D]                  # (tq, D)
            s = jax.lax.dot_general(qh, k, (((1,), (1,)), ((), ())),
                                    preferred_element_type=jnp.float32) * scale
            if masked:
                s = jnp.where(keep, s, -1e30)
            m_prev = m_sc[r]
            m_new = jnp.maximum(m_prev, s.max(axis=-1, keepdims=True))
            alpha = jnp.exp(m_prev - m_new)
            p = jnp.exp(s - m_new)
            l_sc[r] = alpha * l_sc[r] + p.sum(axis=-1, keepdims=True)
            acc_sc[r] = alpha * acc_sc[r] + jnp.dot(
                p.astype(v.dtype), v, preferred_element_type=jnp.float32)
            m_sc[r] = m_new

    @pl.when(ki < qi)          # strictly below the diagonal: no mask work needed
    def _below():
        process(masked=False)

    @pl.when(ki == qi)         # diagonal block: apply the causal mask
    def _diag():
        process(masked=True)

    @pl.when(ki == pl.num_programs(3) - 1)
    def _finalize():
        outs = []
        for r in range(rep):
            # approx=True would move this to the EUP; kept exact for the tight
            # correctness tolerance at these test shapes.
            inv = pl.reciprocal(l_sc[r], approx=False)
            outs.append(acc_sc[r] * inv)
        o_ref[0, 0] = jnp.concatenate(outs, axis=-1).astype(o_ref.dtype)


# --------------------------------------------------------------------------
# Kernel 3: output projection, reducing over kv groups (grid axis "arbitrary").
# --------------------------------------------------------------------------
def outproj_kernel(ctx_ref, w_ref, b_ref, o_ref, acc_ref):
    g = pl.program_id(2)

    @pl.when(g == 0)
    def _init():
        acc_ref[...] = jnp.broadcast_to(b_ref[...], acc_ref.shape).astype(jnp.float32)

    acc_ref[...] += jnp.dot(ctx_ref[0, 0], w_ref[0],
                            preferred_element_type=jnp.float32)

    @pl.when(g == pl.num_programs(2) - 1)
    def _fin():
        o_ref[0] = acc_ref[...].astype(o_ref.dtype)


# --------------------------------------------------------------------------
# Wrapper: full MultiQueryAttention forward
# --------------------------------------------------------------------------
def mqa_forward(x, params, num_heads, num_kv_heads):
    B, T, C = x.shape
    H, Hkv = num_heads, num_kv_heads
    assert H % Hkv == 0 and C % H == 0
    D = C // H
    half = D // 2
    rep = H // Hkv
    dtype = x.dtype

    # ---- one-time, tiny wrapper-side packing (no full-tensor round trips) ----
    def per_head_even_odd(w, b, n_heads):
        w3 = w.reshape(C, n_heads, D)
        w3 = jnp.concatenate([w3[..., 0::2], w3[..., 1::2]], axis=-1)
        b2 = b.reshape(n_heads, D)
        b2 = jnp.concatenate([b2[..., 0::2], b2[..., 1::2]], axis=-1)
        return w3.reshape(C, n_heads * D), b2.reshape(n_heads * D)

    wq_p, bq_p = per_head_even_odd(params["wq"], params["bq"], H)
    wk_p, bk_p = per_head_even_odd(params["wk"], params["bk"], Hkv)
    w_all = jnp.concatenate([wq_p, wk_p, params["wv"]], axis=1)       # (C, Ntot)
    b_all = jnp.concatenate([bq_p, bk_p, params["bv"]], axis=0).reshape(1, -1)
    n_tot = w_all.shape[1]

    # Only a (T, half) RoPE table is streamed; broadcast across heads in-kernel.
    inv_freq = 1.0 / (10000.0 ** (jnp.arange(0, D, 2, dtype=jnp.float32) / D))
    freqs = jnp.arange(T, dtype=jnp.float32)[:, None] * inv_freq[None, :]
    cos_t, sin_t = jnp.cos(freqs), jnp.sin(freqs)                     # (T, half)

    tt = _pick_tile(T, pref=256)
    nT = T // tt

    q_g, k_g, v_g = pl.pallas_call(
        functools.partial(qkv_rope_kernel, num_heads=H, num_kv_heads=Hkv, head_dim=D),
        out_shape=(
            jax.ShapeDtypeStruct((Hkv, B, T, rep * D), dtype),
            jax.ShapeDtypeStruct((Hkv, B, T, D), dtype),
            jax.ShapeDtypeStruct((Hkv, B, T, D), dtype),
        ),
        grid_spec=pltpu.PrefetchScalarGridSpec(
            num_scalar_prefetch=0,
            grid=(B, nT),
            in_specs=[
                pl.BlockSpec((1, tt, C), lambda b, t: (b, t, 0)),          # x
                pl.BlockSpec((C, n_tot), lambda b, t: (0, 0)),             # packed W (resident)
                pl.BlockSpec((1, n_tot), lambda b, t: (0, 0)),             # packed bias
                pl.BlockSpec((tt, half), lambda b, t: (t, 0)),             # cos(T, half)
                pl.BlockSpec((tt, half), lambda b, t: (t, 0)),             # sin(T, half)
            ],
            out_specs=[
                pl.BlockSpec((Hkv, 1, tt, rep * D), lambda b, t: (0, b, t, 0)),
                pl.BlockSpec((Hkv, 1, tt, D), lambda b, t: (0, b, t, 0)),
                pl.BlockSpec((Hkv, 1, tt, D), lambda b, t: (0, b, t, 0)),
            ],
        ),
        compiler_params=pltpu.CompilerParams(
            dimension_semantics=("parallel", "parallel")),
    )(x, w_all, b_all, cos_t, sin_t)

    # ---- causal flash MQA attention: all rep q heads of a kv head per step ----
    tq = _pick_tile(T, pref=256)          # prefer 256 on v6e/v7x; 128 is ideal on v5e
    tk = tq
    nq, nk = T // tq, T // tk
    scale = 1.0 / math.sqrt(D)

    ctx_g = pl.pallas_call(
        functools.partial(mqa_flash_kernel, scale=scale, rep=rep, head_dim=D),
        out_shape=jax.ShapeDtypeStruct((Hkv, B, T, rep * D), dtype),
        grid_spec=pltpu.PrefetchScalarGridSpec(
            num_scalar_prefetch=0,
            grid=(B, Hkv, nq, nk),
            in_specs=[
                pl.BlockSpec((1, 1, tq, rep * D),
                             lambda b, g, qi, ki: (g, b, qi, 0)),
                # Clamp to min(ki, qi): above-diagonal steps keep the resident
                # block so Pallas skips the (useless) K/V DMA.
                pl.BlockSpec((1, 1, tk, D),
                             lambda b, g, qi, ki: (g, b, jnp.minimum(ki, qi), 0)),
                pl.BlockSpec((1, 1, tk, D),
                             lambda b, g, qi, ki: (g, b, jnp.minimum(ki, qi), 0)),
            ],
            out_specs=pl.BlockSpec((1, 1, tq, rep * D),
                                   lambda b, g, qi, ki: (g, b, qi, 0)),
            scratch_shapes=[
                pltpu.VMEM((rep, tq, 1), jnp.float32),   # running max per head
                pltpu.VMEM((rep, tq, 1), jnp.float32),   # running denom per head
                pltpu.VMEM((rep, tq, D), jnp.float32),   # output accumulator per head
            ],
        ),
        compiler_params=pltpu.CompilerParams(
            dimension_semantics=("parallel", "parallel", "parallel", "arbitrary")),
    )(q_g, k_g, v_g)

    # ---- output projection: reduce over kv groups, no XLA transpose needed ----
    wo_g = params["wo"].reshape(Hkv, rep * D, C)      # free reshape (rows grouped by g)
    bo = params["bo"].reshape(1, C)

    out = pl.pallas_call(
        outproj_kernel,
        out_shape=jax.ShapeDtypeStruct((B, T, C), dtype),
        grid_spec=pltpu.PrefetchScalarGridSpec(
            num_scalar_prefetch=0,
            grid=(B, nT, Hkv),
            in_specs=[
                pl.BlockSpec((1, 1, tt, rep * D), lambda b, t, g: (g, b, t, 0)),
                pl.BlockSpec((1, rep * D, C), lambda b, t, g: (g, 0, 0)),
                pl.BlockSpec((1, C), lambda b, t, g: (0, 0)),
            ],
            out_specs=pl.BlockSpec((1, tt, C), lambda b, t, g: (b, t, 0)),
            scratch_shapes=[pltpu.VMEM((tt, C), jnp.float32)],
        ),
        compiler_params=pltpu.CompilerParams(
            dimension_semantics=("parallel", "parallel", "arbitrary")),
    )(ctx_g, wo_g, bo)

    return out


# --------------------------------------------------------------------------
# Pure-JAX reference mirroring the PyTorch module exactly
# --------------------------------------------------------------------------
def mqa_reference(x, params, num_heads, num_kv_heads):
    B, T, C = x.shape
    D = C // num_heads
    q = (x @ params["wq"] + params["bq"]).reshape(B, T, num_heads, D).transpose(0, 2, 1, 3)
    k = (x @ params["wk"] + params["bk"]).reshape(B, T, num_kv_heads, D).transpose(0, 2, 1, 3)
    v = (x @ params["wv"] + params["bv"]).reshape(B, T, num_kv_heads, D).transpose(0, 2, 1, 3)

    inv_freq = 1.0 / (10000.0 ** (jnp.arange(0, D, 2, dtype=jnp.float32) / D))
    freqs = jnp.arange(T, dtype=jnp.float32)[:, None] * inv_freq[None, :]
    cos, sin = jnp.cos(freqs), jnp.sin(freqs)

    def rot(t):
        t1, t2 = t[..., 0::2], t[..., 1::2]
        return jnp.concatenate([t1 * cos - t2 * sin, t1 * sin - t2 * cos], axis=-1)

    q, k = rot(q), rot(k)
    if num_heads != num_kv_heads:
        r = num_heads // num_kv_heads
        k = jnp.repeat(k, r, axis=1)
        v = jnp.repeat(v, r, axis=1)
    scores = jnp.einsum("bhqd,bhkd->bhqk", q, k) / math.sqrt(D)
    mask = jnp.tril(jnp.ones((T, T), dtype=bool))
    scores = jnp.where(mask, scores, -jnp.inf)
    attn = jax.nn.softmax(scores, axis=-1)
    ctx = jnp.einsum("bhqk,bhkd->bhqd", attn, v)
    out = ctx.transpose(0, 2, 1, 3).reshape(B, T, C)
    return out @ params["wo"] + params["bo"]


if __name__ == "__main__":
    key = jax.random.PRNGKey(0)
    batch, seq, dim = 2, 8, 32
    num_heads, num_kv_heads = 4, 2
    head_dim = dim // num_heads

    keys = jax.random.split(key, 9)
    x = jax.random.normal(keys[0], (batch, seq, dim), dtype=jnp.float32)

    def linear_init(kw, kb, fan_in, fan_out):
        bound = 1.0 / math.sqrt(fan_in)
        w_pt = jax.random.uniform(kw, (fan_out, fan_in), minval=-bound, maxval=bound,
                                  dtype=jnp.float32)
        b_pt = jax.random.uniform(kb, (fan_out,), minval=-bound, maxval=bound,
                                  dtype=jnp.float32)
        return w_pt.T, b_pt                 # store (in, out) so y = x @ W + b

    kv_out = head_dim * num_kv_heads
    wq, bq = linear_init(keys[1], keys[2], dim, dim)
    wk, bk = linear_init(keys[3], keys[4], dim, kv_out)
    wv, bv = linear_init(keys[5], keys[6], dim, kv_out)
    wo, bo = linear_init(keys[7], keys[8], dim, dim)
    params = dict(wq=wq, bq=bq, wk=wk, bk=bk, wv=wv, bv=bv, wo=wo, bo=bo)

    y = mqa_forward(x, params, num_heads, num_kv_heads)
    y = jax.block_until_ready(y)

    y_ref = mqa_reference(x, params, num_heads, num_kv_heads)
    assert y.shape == (batch, seq, dim)
    assert jnp.allclose(y, y_ref, atol=1e-4, rtol=1e-4), float(jnp.max(jnp.abs(y - y_ref)))

    print("KERNEL_OK")
</pallas_src>

<mosaic_0001>
module attributes {stable_mosaic.version = 11 : i64} {
  func.func @qkv_rope_kernel(%arg0: i32, %arg1: i32, %arg2: memref<1x8x32xf32, #tpu.memory_space<vmem>>, %arg3: memref<32x64xf32, #tpu.memory_space<vmem>>, %arg4: memref<1x64xf32, #tpu.memory_space<vmem>>, %arg5: memref<8x4xf32, #tpu.memory_space<vmem>>, %arg6: memref<8x4xf32, #tpu.memory_space<vmem>>, %arg7: memref<2x1x8x16xf32, #tpu.memory_space<vmem>>, %arg8: memref<2x1x8x8xf32, #tpu.memory_space<vmem>>, %arg9: memref<2x1x8x8xf32, #tpu.memory_space<vmem>>) attributes {dimension_semantics = [#tpu.dimension_semantics<parallel>, #tpu.dimension_semantics<parallel>], iteration_bounds = array<i64: 2, 1>, scalar_prefetch = 0 : i64, scratch_operands = 0 : i64, tpu.core_type = #tpu.core_type<tc>, window_params = [{transform_indices = @transform_0, window_bounds = array<i64: 1, 8, 32>}, {pipeline_mode = #tpu.pipeline_mode<synchronous>, transform_indices = @transform_1, window_bounds = array<i64: 32, 64>}, {pipeline_mode = #tpu.pipeline_mode<synchronous>, transform_indices = @transform_2, window_bounds = array<i64: 1, 64>}, {transform_indices = @transform_3, window_bounds = array<i64: 8, 4>}, {transform_indices = @transform_4, window_bounds = array<i64: 8, 4>}, {transform_indices = @transform_5, window_bounds = array<i64: 2, 1, 8, 16>}, {transform_indices = @transform_6, window_bounds = array<i64: 2, 1, 8, 8>}, {transform_indices = @transform_7, window_bounds = array<i64: 2, 1, 8, 8>}]} {
    %c0 = arith.constant 0 : index
    %c0_0 = arith.constant 0 : index
    %c0_1 = arith.constant 0 : index
    %0 = vector.load %arg2[%c0, %c0_0, %c0_1] : memref<1x8x32xf32, #tpu.memory_space<vmem>>, vector<1x8x32xf32>
    %1 = vector.shape_cast %0 : vector<1x8x32xf32> to vector<8x32xf32>
    %c0_2 = arith.constant 0 : index
    %c0_3 = arith.constant 0 : index
    %2 = vector.load %arg3[%c0_2, %c0_3] : memref<32x64xf32, #tpu.memory_space<vmem>>, vector<32x64xf32>
    %cst = arith.constant dense<0.000000e+00> : vector<8x64xf32>
    %3 = tpu.matmul %1, %2, %cst {dimension_numbers = #tpu.dot_dimension_numbers<[1], [0], [0], [1], [0, 0, 1, 1], [], []>} : vector<8x32xf32>, vector<32x64xf32>, vector<8x64xf32> -> vector<8x64xf32>
    %c0_4 = arith.constant 0 : index
    %c0_5 = arith.constant 0 : index
    %4 = vector.load %arg4[%c0_4, %c0_5] : memref<1x64xf32, #tpu.memory_space<vmem>>, vector<1x64xf32>
    %5 = vector.broadcast %4 : vector<1x64xf32> to vector<8x64xf32>
    %6 = arith.addf %3, %5 : vector<8x64xf32>
    %c0_6 = arith.constant 0 : index
    %c0_7 = arith.constant 0 : index
    %7 = vector.load %arg5[%c0_6, %c0_7] : memref<8x4xf32, #tpu.memory_space<vmem>>, vector<8x4xf32>
    %c0_8 = arith.constant 0 : index
    %c0_9 = arith.constant 0 : index
    %8 = vector.load %arg6[%c0_8, %c0_9] : memref<8x4xf32, #tpu.memory_space<vmem>>, vector<8x4xf32>
    %9 = vector.extract_strided_slice %6 {offsets = [0, 0], sizes = [8, 4], strides = [1, 1]} : vector<8x64xf32> to vector<8x4xf32>
    %10 = vector.extract_strided_slice %6 {offsets = [0, 4], sizes = [8, 4], strides = [1, 1]} : vector<8x64xf32> to vector<8x4xf32>
    %11 = arith.mulf %9, %7 : vector<8x4xf32>
    %12 = arith.mulf %10, %8 : vector<8x4xf32>
    %13 = arith.subf %11, %12 : vector<8x4xf32>
    %14 = arith.mulf %9, %8 : vector<8x4xf32>
    %15 = arith.mulf %10, %7 : vector<8x4xf32>
    %16 = arith.subf %14, %15 : vector<8x4xf32>
    %17 = tpu.concatenate %13, %16 in 1 : vector<8x4xf32>, vector<8x4xf32> -> vector<8x8xf32>
    %18 = vector.extract_strided_slice %6 {offsets = [0, 8], sizes = [8, 4], strides = [1, 1]} : vector<8x64xf32> to vector<8x4xf32>
    %19 = vector.extract_strided_slice %6 {offsets = [0, 12], sizes = [8, 4], strides = [1, 1]} : vector<8x64xf32> to vector<8x4xf32>
    %20 = arith.mulf %18, %7 : vector<8x4xf32>
    %21 = arith.mulf %19, %8 : vector<8x4xf32>
    %22 = arith.subf %20, %21 : vector<8x4xf32>
    %23 = arith.mulf %18, %8 : vector<8x4xf32>
    %24 = arith.mulf %19, %7 : vector<8x4xf32>
    %25 = arith.subf %23, %24 : vector<8x4xf32>
    %26 = tpu.concatenate %22, %25 in 1 : vector<8x4xf32>, vector<8x4xf32> -> vector<8x8xf32>
    %27 = tpu.concatenate %17, %26 in 1 : vector<8x8xf32>, vector<8x8xf32> -> vector<8x16xf32>
    %c0_10 = arith.constant 0 : index
    %c0_11 = arith.constant 0 : index
    %c0_12 = arith.constant 0 : index
    %c0_13 = arith.constant 0 : index
    %28 = vector.load %arg7[%c0_10, %c0_11, %c0_12, %c0_13] : memref<2x1x8x16xf32, #tpu.memory_space<vmem>>, vector<1x1x8x16xf32>
    %29 = vector.shape_cast %28 : vector<1x1x8x16xf32> to vector<8x16xf32>
    %30 = vector.shape_cast %27 : vector<8x16xf32> to vector<1x1x8x16xf32>
    tpu.vector_store %arg7[%c0_10, %c0_11, %c0_12, %c0_13], %30 {strides = array<i32>} : memref<2x1x8x16xf32, #tpu.memory_space<vmem>>, vector<1x1x8x16xf32>,
    %31 = vector.extract_strided_slice %6 {offsets = [0, 32], sizes = [8, 4], strides = [1, 1]} : vector<8x64xf32> to vector<8x4xf32>
    %32 = vector.extract_strided_slice %6 {offsets = [0, 36], sizes = [8, 4], strides = [1, 1]} : vector<8x64xf32> to vector<8x4xf32>
    %33 = arith.mulf %31, %7 : vector<8x4xf32>
    %34 = arith.mulf %32, %8 : vector<8x4xf32>
    %35 = arith.subf %33, %34 : vector<8x4xf32>
    %36 = arith.mulf %31, %8 : vector<8x4xf32>
    %37 = arith.mulf %32, %7 : vector<8x4xf32>
    %38 = arith.subf %36, %37 : vector<8x4xf32>
    %39 = tpu.concatenate %35, %38 in 1 : vector<8x4xf32>, vector<8x4xf32> -> vector<8x8xf32>
    %c0_14 = arith.constant 0 : index
    %c0_15 = arith.constant 0 : index
    %c0_16 = arith.constant 0 : index
    %c0_17 = arith.constant 0 : index
    %40 = vector.load %arg8[%c0_14, %c0_15, %c0_16, %c0_17] : memref<2x1x8x8xf32, #tpu.memory_space<vmem>>, vector<1x1x8x8xf32>
    %41 = vector.shape_cast %40 : vector<1x1x8x8xf32> to vector<8x8xf32>
    %42 = vector.shape_cast %39 : vector<8x8xf32> to vector<1x1x8x8xf32>
    tpu.vector_store %arg8[%c0_14, %c0_15, %c0_16, %c0_17], %42 {strides = array<i32>} : memref<2x1x8x8xf32, #tpu.memory_space<vmem>>, vector<1x1x8x8xf32>,
    %43 = vector.extract_strided_slice %6 {offsets = [0, 48], sizes = [8, 8], strides = [1, 1]} : vector<8x64xf32> to vector<8x8xf32>
    %c0_18 = arith.constant 0 : index
    %c0_19 = arith.constant 0 : index
    %c0_20 = arith.constant 0 : index
    %c0_21 = arith.constant 0 : index
    %44 = vector.load %arg9[%c0_18, %c0_19, %c0_20, %c0_21] : memref<2x1x8x8xf32, #tpu.memory_space<vmem>>, vector<1x1x8x8xf32>
    %45 = vector.shape_cast %44 : vector<1x1x8x8xf32> to vector<8x8xf32>
    %46 = vector.shape_cast %43 : vector<8x8xf32> to vector<1x1x8x8xf32>
    tpu.vector_store %arg9[%c0_18, %c0_19, %c0_20, %c0_21], %46 {strides = array<i32>} : memref<2x1x8x8xf32, #tpu.memory_space<vmem>>, vector<1x1x8x8xf32>,
    %47 = vector.extract_strided_slice %6 {offsets = [0, 16], sizes = [8, 4], strides = [1, 1]} : vector<8x64xf32> to vector<8x4xf32>
    %48 = vector.extract_strided_slice %6 {offsets = [0, 20], sizes = [8, 4], strides = [1, 1]} : vector<8x64xf32> to vector<8x4xf32>
    %49 = arith.mulf %47, %7 : vector<8x4xf32>
    %50 = arith.mulf %48, %8 : vector<8x4xf32>
    %51 = arith.subf %49, %50 : vector<8x4xf32>
    %52 = arith.mulf %47, %8 : vector<8x4xf32>
    %53 = arith.mulf %48, %7 : vector<8x4xf32>
    %54 = arith.subf %52, %53 : vector<8x4xf32>
    %55 = tpu.concatenate %51, %54 in 1 : vector<8x4xf32>, vector<8x4xf32> -> vector<8x8xf32>
    %56 = vector.extract_strided_slice %6 {offsets = [0, 24], sizes = [8, 4], strides = [1, 1]} : vector<8x64xf32> to vector<8x4xf32>
    %57 = vector.extract_strided_slice %6 {offsets = [0, 28], sizes = [8, 4], strides = [1, 1]} : vector<8x64xf32> to vector<8x4xf32>
    %58 = arith.mulf %56, %7 : vector<8x4xf32>
    %59 = arith.mulf %57, %8 : vector<8x4xf32>
    %60 = arith.subf %58, %59 : vector<8x4xf32>
    %61 = arith.mulf %56, %8 : vector<8x4xf32>
    %62 = arith.mulf %57, %7 : vector<8x4xf32>
    %63 = arith.subf %61, %62 : vector<8x4xf32>
    %64 = tpu.concatenate %60, %63 in 1 : vector<8x4xf32>, vector<8x4xf32> -> vector<8x8xf32>
    %65 = tpu.concatenate %55, %64 in 1 : vector<8x8xf32>, vector<8x8xf32> -> vector<8x16xf32>
    %c1 = arith.constant 1 : index
    %c0_22 = arith.constant 0 : index
    %c0_23 = arith.constant 0 : index
    %c0_24 = arith.constant 0 : index
    %66 = vector.load %arg7[%c1, %c0_22, %c0_23, %c0_24] : memref<2x1x8x16xf32, #tpu.memory_space<vmem>>, vector<1x1x8x16xf32>
    %67 = vector.shape_cast %66 : vector<1x1x8x16xf32> to vector<8x16xf32>
    %68 = vector.shape_cast %65 : vector<8x16xf32> to vector<1x1x8x16xf32>
    tpu.vector_store %arg7[%c1, %c0_22, %c0_23, %c0_24], %68 {strides = array<i32>} : memref<2x1x8x16xf32, #tpu.memory_space<vmem>>, vector<1x1x8x16xf32>,
    %69 = vector.extract_strided_slice %6 {offsets = [0, 40], sizes = [8, 4], strides = [1, 1]} : vector<8x64xf32> to vector<8x4xf32>
    %70 = vector.extract_strided_slice %6 {offsets = [0, 44], sizes = [8, 4], strides = [1, 1]} : vector<8x64xf32> to vector<8x4xf32>
    %71 = arith.mulf %69, %7 : vector<8x4xf32>
    %72 = arith.mulf %70, %8 : vector<8x4xf32>
    %73 = arith.subf %71, %72 : vector<8x4xf32>
    %74 = arith.mulf %69, %8 : vector<8x4xf32>
    %75 = arith.mulf %70, %7 : vector<8x4xf32>
    %76 = arith.subf %74, %75 : vector<8x4xf32>
    %77 = tpu.concatenate %73, %76 in 1 : vector<8x4xf32>, vector<8x4xf32> -> vector<8x8xf32>
    %c1_25 = arith.constant 1 : index
    %c0_26 = arith.constant 0 : index
    %c0_27 = arith.constant 0 : index
    %c0_28 = arith.constant 0 : index
    %78 = vector.load %arg8[%c1_25, %c0_26, %c0_27, %c0_28] : memref<2x1x8x8xf32, #tpu.memory_space<vmem>>, vector<1x1x8x8xf32>
    %79 = vector.shape_cast %78 : vector<1x1x8x8xf32> to vector<8x8xf32>
    %80 = vector.shape_cast %77 : vector<8x8xf32> to vector<1x1x8x8xf32>
    tpu.vector_store %arg8[%c1_25, %c0_26, %c0_27, %c0_28], %80 {strides = array<i32>} : memref<2x1x8x8xf32, #tpu.memory_space<vmem>>, vector<1x1x8x8xf32>,
    %81 = vector.extract_strided_slice %6 {offsets = [0, 56], sizes = [8, 8], strides = [1, 1]} : vector<8x64xf32> to vector<8x8xf32>
    %c1_29 = arith.constant 1 : index
    %c0_30 = arith.constant 0 : index
    %c0_31 = arith.constant 0 : index
    %c0_32 = arith.constant 0 : index
    %82 = vector.load %arg9[%c1_29, %c0_30, %c0_31, %c0_32] : memref<2x1x8x8xf32, #tpu.memory_space<vmem>>, vector<1x1x8x8xf32>
    %83 = vector.shape_cast %82 : vector<1x1x8x8xf32> to vector<8x8xf32>
    %84 = vector.shape_cast %81 : vector<8x8xf32> to vector<1x1x8x8xf32>
    tpu.vector_store %arg9[%c1_29, %c0_30, %c0_31, %c0_32], %84 {strides = array<i32>} : memref<2x1x8x8xf32, #tpu.memory_space<vmem>>, vector<1x1x8x8xf32>,
    return
  }
  func.func @transform_0(%arg0: i32, %arg1: i32) -> (i32, i32, i32) {
    %c0_i32 = arith.constant 0 : i32
    %c0_i32_0 = arith.constant 0 : i32
    return %arg0, %arg1, %c0_i32 : i32, i32, i32
  }
  func.func @transform_1(%arg0: i32, %arg1: i32) -> (i32, i32) {
    %c0_i32 = arith.constant 0 : i32
    %c0_i32_0 = arith.constant 0 : i32
    %c0_i32_1 = arith.constant 0 : i32
    return %c0_i32, %c0_i32_0 : i32, i32
  }
  func.func @transform_2(%arg0: i32, %arg1: i32) -> (i32, i32) {
    %c0_i32 = arith.constant 0 : i32
    %c0_i32_0 = arith.constant 0 : i32
    %c0_i32_1 = arith.constant 0 : i32
    return %c0_i32, %c0_i32_0 : i32, i32
  }
  func.func @transform_3(%arg0: i32, %arg1: i32) -> (i32, i32) {
    %c0_i32 = arith.constant 0 : i32
    %c0_i32_0 = arith.constant 0 : i32
    return %arg1, %c0_i32 : i32, i32
  }
  func.func @transform_4(%arg0: i32, %arg1: i32) -> (i32, i32) {
    %c0_i32 = arith.constant 0 : i32
    %c0_i32_0 = arith.constant 0 : i32
    return %arg1, %c0_i32 : i32, i32
  }
  func.func @transform_5(%arg0: i32, %arg1: i32) -> (i32, i32, i32, i32) {
    %c0_i32 = arith.constant 0 : i32
    %c0_i32_0 = arith.constant 0 : i32
    %c0_i32_1 = arith.constant 0 : i32
    return %c0_i32, %arg0, %arg1, %c0_i32_0 : i32, i32, i32, i32
  }
  func.func @transform_6(%arg0: i32, %arg1: i32) -> (i32, i32, i32, i32) {
    %c0_i32 = arith.constant 0 : i32
    %c0_i32_0 = arith.constant 0 : i32
    %c0_i32_1 = arith.constant 0 : i32
    return %c0_i32, %arg0, %arg1, %c0_i32_0 : i32, i32, i32, i32
  }
  func.func @transform_7(%arg0: i32, %arg1: i32) -> (i32, i32, i32, i32) {
    %c0_i32 = arith.constant 0 : i32
    %c0_i32_0 = arith.constant 0 : i32
    %c0_i32_1 = arith.constant 0 : i32
    return %c0_i32, %arg0, %arg1, %c0_i32_0 : i32, i32, i32, i32
  }
}

</mosaic_0001>

<llo_original>
// kernel: tpu_custom_call.1
$region0: #{tpu_custom_call.1}
  #allocation0 [shape = 'u32[]', space=smem, size = 0x4, offset = 0x4, fixed_abs, tag = 'smem constant byte address 0x4 - core index']
  #allocation1 [shape = 'u32[72,128]{1,0:T(1,128)}', space=vmem, size = 0x9000, scoped, tag = 'internal scratch']
  %s0 = inlined_call_operand.vmem [shape: f32[2,8,32], index: 0, kind: input, shape index: {}]
  %s1 = inlined_call_operand.hbm [shape: f32[32,64], index: 1, kind: input, shape index: {}]
  %s2 = inlined_call_operand.vmem [shape: f32[1,64], index: 2, kind: input, shape index: {}]
  %s3 = inlined_call_operand.vmem [shape: f32[8,4], index: 3, kind: input, shape index: {}]
  %s4 = inlined_call_operand.vmem [shape: f32[8,4], index: 4, kind: input, shape index: {}]
  %s5 = inlined_call_operand.hbm [shape: f32[2,2,8,16], index: 5, kind: output, shape index: {0}]
  %s6 = inlined_call_operand.hbm [shape: f32[2,2,8,8], index: 6, kind: output, shape index: {1}]
  %s7 = inlined_call_operand.hbm [shape: f32[2,2,8,8], index: 7, kind: output, shape index: {2}]
  %8 = xla_tuple %s5, %s6, %s7
  %s9 = sld [smem:[#allocation0]]
  $region73: #{tpu_custom_call.1} parent=0
    _
  %s11 = ssub.s32 1, %s9
  %s12 = scalar_select 0, %s11, %s9
  $region1: #{tpu_custom_call.1} parent=0
    #allocation2 [shape = 'u8[16384]{0}', space=vmem, size = 0x4000, scoped, tag = 'input window, operand 1, single buffered']
    #allocation3 [shape = 's32[2]{0}', space=sflag, size = 0x8, scoped, tag = 'scoped memory for tpu_custom_call.1']
    #allocation4 [shape = 's32[2]{0}', space=sflag, size = 0x8, scoped, tag = 'scoped memory for tpu_custom_call.1']
    #allocation5 [shape = 'u8[16384]{0}', space=vmem, size = 0x4000, scoped, tag = 'output window, operand 0']
    #allocation6 [shape = 'u8[16384]{0}', space=vmem, size = 0x4000, scoped, tag = 'output window, operand 1']
    #allocation7 [shape = 's32[2]{0}', space=sflag, size = 0x8, scoped, tag = 'scoped memory for tpu_custom_call.1']
    #allocation8 [shape = 'u8[16384]{0}', space=vmem, size = 0x4000, scoped, tag = 'output window, operand 2']
    %13 = vsyncpa [#allocation3], 0
    %14 = vsyncpa [#allocation4], 0
    %s15 = scalar_lea.sflag [#allocation4], 1
    %16 = vsyncpa %s15, 0
    %17 = vsyncpa [#allocation7], 0
    %s18 = scalar_lea.sflag [#allocation7], 1
    %19 = vsyncpa %s18, 0
    loop: start=0, step=1, limit=4
    $region2: #{tpu_custom_call.1} parent=1 // loop_pre_header
      _
    $region3: #{tpu_custom_call.1} parent=1 // loop_header
      %s21 = sphi 0, %s25
      %p22 = scmp.ge.s32.totalorder %s21, 4
      %s28 = sphi 0, %s40
      %s29 = sphi 0, %s36
      %s30 = sphi 0, %s28
      %s31 = sphi 0, %s29
      %s32 = sphi 0, %s30
      %s33 = sphi 0, %s31
      %s45 = sphi 0, %s47
      %s48 = sphi 0, %s45
      %s49 = sphi 0, %s48
      %s65 = sphi 0, %s49
      %s69 = sphi 0, %s69
      %s71 = sphi 0, %s69
      %s72 = sphi 0, %s71
      %s86 = sphi 0, %s72
      %s90 = sphi 0, %s90
      %s92 = sphi 0, %s90
      %s93 = sphi 0, %s92
      %s107 = sphi 0, %s93
      %s113 = sphi 0, %s115
      %s116 = sphi 0, %s113
      %s117 = sphi 0, %s116
      %s133 = sphi 0, %s117
      %s139 = sphi 0, %s141
      %s142 = sphi 0, %s139
      %s143 = sphi 0, %s142
      %s159 = sphi 0, %s143
      %s167 = sphi 0, %s169
      %s170 = sphi 0, %s167
      %s171 = sphi 0, %s170
      %s187 = sphi 0, %s171
      %s195 = sphi 0, %s197
      %s198 = sphi 0, %s195
      %s199 = sphi 0, %s198
      %s215 = sphi 0, %s199
      %s223 = sphi 0, %s225
      %s226 = sphi 0, %s223
      %s227 = sphi 0, %s226
      %s243 = sphi 0, %s227
    $region4: #{tpu_custom_call.1} parent=1 // loop_header_branch
      %24 = sbr.rel (%p22) target = $region8
    $region5: #{tpu_custom_call.1} parent=1 // loop_body
      %s26 = ssub.s32 %s21, 1
      %s27 = ssub.s32 %s21, 2
      %s34 = sadd.s32 1, %s29
      %p35 = scmp.ge.s32.totalorder %s34, 1
      %s36 = scalar_select %p35, 0, %s34
      %s37 = sadd.s32 1, %s28
      %s38 = scalar_select %p35, %s37, %s28
      %p39 = scmp.ge.s32.totalorder %s38, 2
      %s40 = scalar_select %p39, 0, %s38
      %s41 = ssub.s32 %s28, %s40
      %s42 = ssub.s32 %s29, %s36
      %s43 = sor.u32 %s41, %s42
      %p44 = scmp.eq.s32.totalorder %s43, 0
      %s46 = sadd.s32 %s45, 1
      %s47 = scalar_select %p44, %s45, %s46
      %p50 = pneg %p44
      %p51 = scmp.eq.s32.totalorder %s21, 1
      %p52 = por %p50, %p51
      %p53 = scmp.ne.s32.totalorder %s45, %s48
      %p54 = scmp.eq.s32.totalorder %s21, 0
      %p55 = por %p53, %p54
      %p56 = scmp.ne.s32.totalorder %s45, %s48
      %p57 = scmp.eq.s32.totalorder %s26, 1
      %p58 = por %p56, %p57
      %p59 = scmp.ne.s32.totalorder %s48, %s49
      %p60 = scmp.eq.s32.totalorder %s26, 0
      %p61 = por %p59, %p60
      %p62 = scmp.ne.s32.totalorder %s48, %s49
      %p63 = scmp.eq.s32.totalorder %s27, 1
      %p64 = por %p62, %p63
      %p66 = scmp.ne.s32.totalorder %s49, %s65
      %p67 = scmp.eq.s32.totalorder %s27, 0
      %p68 = por %p66, %p67
      %s70 = sadd.s32 %s69, 1
      %p73 = scmp.eq.s32.totalorder %s21, 1
      %p74 = scmp.ne.s32.totalorder %s69, %s71
      %p75 = scmp.eq.s32.totalorder %s21, 0
      %p76 = por %p74, %p75
      %p77 = scmp.ne.s32.totalorder %s69, %s71
      %p78 = scmp.eq.s32.totalorder %s26, 1
      %p79 = por %p77, %p78
      %p80 = scmp.ne.s32.totalorder %s71, %s72
      %p81 = scmp.eq.s32.totalorder %s26, 0
      %p82 = por %p80, %p81
      %p83 = scmp.ne.s32.totalorder %s71, %s72
      %p84 = scmp.eq.s32.totalorder %s27, 1
      %p85 = por %p83, %p84
      %p87 = scmp.ne.s32.totalorder %s72, %s86
      %p88 = scmp.eq.s32.totalorder %s27, 0
      %p89 = por %p87, %p88
      %s91 = sadd.s32 %s90, 1
      %p94 = scmp.eq.s32.totalorder %s21, 1
      %p95 = scmp.ne.s32.totalorder %s90, %s92
      %p96 = scmp.eq.s32.totalorder %s21, 0
      %p97 = por %p95, %p96
      %p98 = scmp.ne.s32.totalorder %s90, %s92
      %p99 = scmp.eq.s32.totalorder %s26, 1
      %p100 = por %p98, %p99
      %p101 = scmp.ne.s32.totalorder %s92, %s93
      %p102 = scmp.eq.s32.totalorder %s26, 0
      %p103 = por %p101, %p102
      %p104 = scmp.ne.s32.totalorder %s92, %s93
      %p105 = scmp.eq.s32.totalorder %s27, 1
      %p106 = por %p104, %p105
      %p108 = scmp.ne.s32.totalorder %s93, %s107
      %p109 = scmp.eq.s32.totalorder %s27, 0
      %p110 = por %p108, %p109
      %s111 = ssub.s32 %s29, %s36
      %p112 = scmp.eq.s32.totalorder %s111, 0
      %s114 = sadd.s32 %s113, 1
      %s115 = scalar_select %p112, %s113, %s114
      %p118 = pneg %p112
      %p119 = scmp.eq.s32.totalorder %s21, 1
      %p120 = por %p118, %p119
      %p121 = scmp.ne.s32.totalorder %s113, %s116
      %p122 = scmp.eq.s32.totalorder %s21, 0
      %p123 = por %p121, %p122
      %p124 = scmp.ne.s32.totalorder %s113, %s116
      %p125 = scmp.eq.s32.totalorder %s26, 1
      %p126 = por %p124, %p125
      %p127 = scmp.ne.s32.totalorder %s116, %s117
      %p128 = scmp.eq.s32.totalorder %s26, 0
      %p129 = por %p127, %p128
      %p130 = scmp.ne.s32.totalorder %s116, %s117
      %p131 = scmp.eq.s32.totalorder %s27, 1
      %p132 = por %p130, %p131
      %p134 = scmp.ne.s32.totalorder %s117, %s133
      %p135 = scmp.eq.s32.totalorder %s27, 0
      %p136 = por %p134, %p135
      %s137 = ssub.s32 %s29, %s36
      %p138 = scmp.eq.s32.totalorder %s137, 0
      %s140 = sadd.s32 %s139, 1
      %s141 = scalar_select %p138, %s139, %s140
      %p144 = pneg %p138
      %p145 = scmp.eq.s32.totalorder %s21, 1
      %p146 = por %p144, %p145
      %p147 = scmp.ne.s32.totalorder %s139, %s142
      %p148 = scmp.eq.s32.totalorder %s21, 0
      %p149 = por %p147, %p148
      %p150 = scmp.ne.s32.totalorder %s139, %s142
      %p151 = scmp.eq.s32.totalorder %s26, 1
      %p152 = por %p150, %p151
      %p153 = scmp.ne.s32.totalorder %s142, %s143
      %p154 = scmp.eq.s32.totalorder %s26, 0
      %p155 = por %p153, %p154
      %p156 = scmp.ne.s32.totalorder %s142, %s143
      %p157 = scmp.eq.s32.totalorder %s27, 1
      %p158 = por %p156, %p157
      %p160 = scmp.ne.s32.totalorder %s143, %s159
      %p161 = scmp.eq.s32.totalorder %s27, 0
      %p162 = por %p160, %p161
      %s163 = ssub.s32 %s28, %s40
      %s164 = ssub.s32 %s29, %s36
      %s165 = sor.u32 %s163, %s164
      %p166 = scmp.eq.s32.totalorder %s165, 0
      %s168 = sadd.s32 %s167, 1
      %s169 = scalar_select %p166, %s167, %s168
      %p172 = pneg %p166
      %p173 = scmp.eq.s32.totalorder %s21, 1
      %p174 = por %p172, %p173
      %p175 = scmp.ne.s32.totalorder %s167, %s170
      %p176 = scmp.eq.s32.totalorder %s21, 0
      %p177 = por %p175, %p176
      %p178 = scmp.ne.s32.totalorder %s167, %s170
      %p179 = scmp.eq.s32.totalorder %s26, 1
      %p180 = por %p178, %p179
      %p181 = scmp.ne.s32.totalorder %s170, %s171
      %p182 = scmp.eq.s32.totalorder %s26, 0
      %p183 = por %p181, %p182
      %p184 = scmp.ne.s32.totalorder %s170, %s171
      %p185 = scmp.eq.s32.totalorder %s27, 1
      %p186 = por %p184, %p185
      %p188 = scmp.ne.s32.totalorder %s171, %s187
      %p189 = scmp.eq.s32.totalorder %s27, 0
      %p190 = por %p188, %p189
      %s191 = ssub.s32 %s28, %s40
      %s192 = ssub.s32 %s29, %s36
      %s193 = sor.u32 %s191, %s192
      %p194 = scmp.eq.s32.totalorder %s193, 0
      %s196 = sadd.s32 %s195, 1
      %s197 = scalar_select %p194, %s195, %s196
      %p200 = pneg %p194
      %p201 = scmp.eq.s32.totalorder %s21, 1
      %p202 = por %p200, %p201
      %p203 = scmp.ne.s32.totalorder %s195, %s198
      %p204 = scmp.eq.s32.totalorder %s21, 0
      %p205 = por %p203, %p204
      %p206 = scmp.ne.s32.totalorder %s195, %s198
      %p207 = scmp.eq.s32.totalorder %s26, 1
      %p208 = por %p206, %p207
      %p209 = scmp.ne.s32.totalorder %s198, %s199
      %p210 = scmp.eq.s32.totalorder %s26, 0
      %p211 = por %p209, %p210
      %p212 = scmp.ne.s32.totalorder %s198, %s199
      %p213 = scmp.eq.s32.totalorder %s27, 1
      %p214 = por %p212, %p213
      %p216 = scmp.ne.s32.totalorder %s199, %s215
      %p217 = scmp.eq.s32.totalorder %s27, 0
      %p218 = por %p216, %p217
      %s219 = ssub.s32 %s28, %s40
      %s220 = ssub.s32 %s29, %s36
      %s221 = sor.u32 %s219, %s220
      %p222 = scmp.eq.s32.totalorder %s221, 0
      %s224 = sadd.s32 %s223, 1
      %s225 = scalar_select %p222, %s223, %s224
      %p228 = pneg %p222
      %p229 = scmp.eq.s32.totalorder %s21, 1
      %p230 = por %p228, %p229
      %p231 = scmp.ne.s32.totalorder %s223, %s226
      %p232 = scmp.eq.s32.totalorder %s21, 0
      %p233 = por %p231, %p232
      %p234 = scmp.ne.s32.totalorder %s223, %s226
      %p235 = scmp.eq.s32.totalorder %s26, 1
      %p236 = por %p234, %p235
      %p237 = scmp.ne.s32.totalorder %s226, %s227
      %p238 = scmp.eq.s32.totalorder %s26, 0
      %p239 = por %p237, %p238
      %p240 = scmp.ne.s32.totalorder %s226, %s227
      %p241 = scmp.eq.s32.totalorder %s27, 1
      %p242 = por %p240, %p241
      %p244 = scmp.ne.s32.totalorder %s227, %s243
      %p245 = scmp.eq.s32.totalorder %s27, 0
      %p246 = por %p244, %p245
      %p247 = scmp.le.s32.totalorder 1, %s21
      %p248 = scmp.lt.s32.totalorder %s21, 3
      %p249 = pnand %p247, %p248
      %p250 = pneg %p249
      // Predicated region
      $region9: #{tpu_custom_call.1} parent=5 // pred_check
        _
      $region10: #{tpu_custom_call.1} parent=5 // pred_check_branch
        %252 = sbr.rel (%p249) target = $region12
      $region11: #{tpu_custom_call.1} parent=5 // pred_region
        %s253 = ssub.s32 %s21, 1
        // Predicated region
        $region13: #{tpu_custom_call.1} parent=11 // pred_check
          %p254 = pneg %p82
        $region14: #{tpu_custom_call.1} parent=11 // pred_check_branch
          %256 = sbr.rel (%p254) target = $region16
        $region15: #{tpu_custom_call.1} parent=11 // pred_region
          %258 = vsyncadd [#allocation3], 0
          %s259 = sshll.u32 %s1, 4
          %s260 = int_to_ptr.hbm [resolvable:$true] %s259
          %s261 = sshll.u32 [#allocation2], 4
          %s262 = int_to_ptr.vmem [resolvable:$true] %s261
          %267 = dma.hbm_to_vmem [thread:$0]  %s260, 512, %s262, [#allocation3], 128, 128, 8
        $region16: #{tpu_custom_call.1} parent=11 // pred_fallthru
          _
        // Predicated region
        $region17: #{tpu_custom_call.1} parent=11 // pred_check
          %p268 = pneg %p103
        $region18: #{tpu_custom_call.1} parent=11 // pred_check_branch
          %270 = sbr.rel (%p268) target = $region20
        $region19: #{tpu_custom_call.1} parent=11 // pred_region
          _
        $region20: #{tpu_custom_call.1} parent=11 // pred_fallthru
          _
        // Predicated region
        $region21: #{tpu_custom_call.1} parent=11 // pred_check
          %p271 = pneg %p129
        $region22: #{tpu_custom_call.1} parent=11 // pred_check_branch
          %273 = sbr.rel (%p271) target = $region24
        $region23: #{tpu_custom_call.1} parent=11 // pred_region
          %p274 = scmp.lt.s32.totalorder %s31, 0
          %s275 = scalar_select %p274, %s31, 0
          %s276 = smul.addr %s275, 8
          %s277 = scalar_lea.vmem %s3, %s276
        $region24: #{tpu_custom_call.1} parent=11 // pred_fallthru
          _
        // Predicated region
        $region25: #{tpu_custom_call.1} parent=11 // pred_check
          %p278 = pneg %p155
        $region26: #{tpu_custom_call.1} parent=11 // pred_check_branch
          %280 = sbr.rel (%p278) target = $region28
        $region27: #{tpu_custom_call.1} parent=11 // pred_region
          %p281 = scmp.lt.s32.totalorder %s31, 0
          %s282 = scalar_select %p281, %s31, 0
          %s283 = smul.addr %s282, 8
          %s284 = scalar_lea.vmem %s4, %s283
        $region28: #{tpu_custom_call.1} parent=11 // pred_fallthru
          _
      $region12: #{tpu_custom_call.1} parent=5 // pred_fallthru
        _
      %p285 = scmp.lt.s32.totalorder %s21, 2
      // Predicated region
      $region29: #{tpu_custom_call.1} parent=5 // pred_check
        %p286 = pneg %p285
      $region30: #{tpu_custom_call.1} parent=5 // pred_check_branch
        %288 = sbr.rel (%p286) target = $region32
      $region31: #{tpu_custom_call.1} parent=5 // pred_region
        // Predicated region
        $region33: #{tpu_custom_call.1} parent=31 // pred_check
          %p289 = pneg %p55
        $region34: #{tpu_custom_call.1} parent=31 // pred_check_branch
          %291 = sbr.rel (%p289) target = $region36
        $region35: #{tpu_custom_call.1} parent=31 // pred_region
          %p292 = scmp.lt.s32.totalorder %s28, 1
          %s293 = scalar_select %p292, %s28, 1
          %p294 = scmp.lt.s32.totalorder %s29, 0
          %s295 = scalar_select %p294, %s29, 0
          %s296 = sadd.s32 %s295, %s293
          %s297 = smul.addr %s296, 8
          %s298 = scalar_lea.vmem %s0, %s297
        $region36: #{tpu_custom_call.1} parent=31 // pred_fallthru
          _
      $region32: #{tpu_custom_call.1} parent=5 // pred_fallthru
        _
      %p299 = scmp.le.s32.totalorder 1, %s21
      %p300 = scmp.lt.s32.totalorder %s21, 3
      %p301 = pnand %p299, %p300
      %p302 = pneg %p301
      // Predicated region
      $region37: #{tpu_custom_call.1} parent=5 // pred_check
        _
      $region38: #{tpu_custom_call.1} parent=5 // pred_check_branch
        %304 = sbr.rel (%p301) target = $region40
      $region39: #{tpu_custom_call.1} parent=5 // pred_region
        %s305 = ssub.s32 %s21, 1
        // Predicated region
        $region41: #{tpu_custom_call.1} parent=39 // pred_check
          %p306 = pneg %p82
        $region42: #{tpu_custom_call.1} parent=39 // pred_check_branch
          %308 = sbr.rel (%p306) target = $region44
        $region43: #{tpu_custom_call.1} parent=39 // pred_region
          %310 = dma.done [#allocation3], 512
        $region44: #{tpu_custom_call.1} parent=39 // pred_fallthru
          _
        %p311 = scmp.lt.s32.totalorder %s30, 1
        %s312 = scalar_select %p311, %s30, 1
        %p313 = scmp.lt.s32.totalorder %s31, 0
        %s314 = scalar_select %p313, %s31, 0
        %s315 = sadd.s32 %s314, %s312
        %s316 = smul.addr %s315, 8
        %s317 = scalar_lea.vmem %s0, %s316
        %p318 = pneg %p61
        %p319 = pneg %p58
        %p320 = pneg %p82
        %p321 = pneg %p79
        %p322 = pneg %p103
        %p323 = pneg %p100
        %p324 = scmp.lt.s32.totalorder %s31, 0
        %s325 = scalar_select %p324, %s31, 0
        %s326 = smul.addr %s325, 8
        %s327 = scalar_lea.vmem %s3, %s326
        %p328 = pneg %p129
        %p329 = pneg %p126
        %p330 = scmp.lt.s32.totalorder %s31, 0
        %s331 = scalar_select %p330, %s31, 0
        %s332 = smul.addr %s331, 8
        %s333 = scalar_lea.vmem %s4, %s332
        %p334 = pneg %p155
        %p335 = pneg %p152
        %p336 = pneg %p183
        %p337 = pneg %p180
        %s338 = sand.u32 %s170, 1
        %s339 = scalar_lea.sflag [#allocation4], %s338
        %s340 = sand.u32 %s170, 1
        %s341 = smul.addr %s340, 16
        %s342 = scalar_lea.vmem [#allocation5], %s341
        %p343 = pneg %p211
        %p344 = pneg %p208
        %s345 = sand.u32 %s26, 1
        %s346 = scalar_lea.sflag [#allocation7], %s345
        %s347 = sand.u32 %s198, 1
        %s348 = smul.addr %s347, 16
        %s349 = scalar_lea.vmem [#allocation6], %s348
        %p350 = pneg %p239
        %p351 = pneg %p236
        %s352 = sand.u32 %s26, 1
        %s353 = scalar_lea.sflag [#allocation7], %s352
        %s354 = sand.u32 %s226, 1
        %s355 = smul.addr %s354, 16
        %s356 = scalar_lea.vmem [#allocation8], %s355
        %p357 = scmp.lt.s32.totalorder %s30, 1
        %s358 = scalar_select %p357, %s30, 1
        %p359 = scmp.lt.s32.totalorder %s31, 0
        %s360 = scalar_select %p359, %s31, 0
        %s361 = sadd.s32 %s360, %s358
        %s362 = smul.addr %s361, 8
        %s363 = scalar_lea.vmem %s0, %s362
        %p364 = scmp.lt.s32.totalorder %s31, 0
        %s365 = scalar_select %p364, %s31, 0
        %s366 = smul.addr %s365, 8
        %s367 = scalar_lea.vmem %s3, %s366
        %p368 = scmp.lt.s32.totalorder %s31, 0
        %s369 = scalar_select %p368, %s31, 0
        %s370 = smul.addr %s369, 8
        %s371 = scalar_lea.vmem %s4, %s370
        %v372 = vld [vmem:[%s363] sm:$0xff]
        %v373 = vld [vmem:[#allocation2] sm:$0xff]
        %v374 = vld [vmem:[#allocation2 + $0x8] sm:$0xff]
        %v375 = vld [vmem:[#allocation2 + $0x10] sm:$0xff]
        %v376 = vld [vmem:[#allocation2 + $0x18] sm:$0xff]
        %v377 = vld [vmem:[%s2] sm:$0x1]
        %v379 = vperm.slane %v377, 0
        %vm381 = vcmask 261120
        %v383 = vsel %vm381, %v372, 0
        %385 = vmatpush.msra.mxu0 0.0
        %386 = vmatpush.msra.mxu0 0.0
        %387 = vmatpush.msra.mxu0 0.0
        %388 = vmatpush.msra.mxu0 0.0
        %389 = vmatpush.msra.mxu0 0.0
        %390 = vmatpush.msra.mxu0 0.0
        %391 = vmatpush.msra.mxu0 0.0
        %392 = vmatpush.msra.mxu0 0.0
        %393 = vmatpush.msra.mxu0 0.0
        %394 = vmatpush.msra.mxu0 0.0
        %395 = vmatpush.msra.mxu0 0.0
        %396 = vmatpush.msra.mxu0 0.0
        %397 = vmatpush.msra.mxu0 %v376
        %398 = vmatpush.msra.mxu0 %v375
        %399 = vmatpush.msra.mxu0 %v374
        %400 = vmatpush.msra.mxu0 %v373
        %401 = vmatmul.f32.gmra.mxu0 %v383
        %v402 = vpop.f32.mrf.mxu0
        %v403 = vadd.f32 %v379, %v402
        %404 = vdwg.mxu0
        %v405 = vld [vmem:[%s367] sm:$0xff]
        %v406 = vld [vmem:[%s371] sm:$0xff]
        %v407 = vmul.f32 %v403, %v405
        %409 = vrot.lane.b32.xlu0 %v406, 4
        %v410 = vpop.permute.xlu0 %409
        %v412 = vmul.f32 %v403, %v410
        %414 = vrot.lane.b32.xlu0 %v412, 124
        %v415 = vpop.permute.xlu0 %414
        %v417 = vsub.f32 %v407, %v415
        %v418 = vmul.f32 %v403, %v406
        %420 = vrot.lane.b32.xlu0 %v405, 4
        %v421 = vpop.permute.xlu0 %420
        %v423 = vmul.f32 %v403, %v421
        %425 = vrot.lane.b32.xlu0 %v423, 124
        %v426 = vpop.permute.xlu0 %425
        %v428 = vsub.f32 %v418, %v426
        %430 = vrot.lane.b32.xlu0 %v428, 4
        %v431 = vpop.permute.xlu0 %430
        %vm433 = vcmask 31744
        %v434 = vsel %vm433, %v417, %v431
        %435 = vrot.lane.b32.xlu0 %v405, 8
        %v436 = vpop.permute.xlu0 %435
        %v438 = vmul.f32 %v403, %v436
        %439 = vrot.lane.b32.xlu0 %v406, 12
        %v440 = vpop.permute.xlu0 %439
        %v442 = vmul.f32 %v403, %v440
        %444 = vrot.lane.b32.xlu0 %v442, 124
        %v445 = vpop.permute.xlu0 %444
        %v447 = vsub.f32 %v438, %v445
        %448 = vrot.lane.b32.xlu0 %v406, 8
        %v449 = vpop.permute.xlu0 %448
        %v451 = vmul.f32 %v403, %v449
        %452 = vrot.lane.b32.xlu0 %v405, 12
        %v453 = vpop.permute.xlu0 %452
        %v455 = vmul.f32 %v403, %v453
        %457 = vrot.lane.b32.xlu0 %v455, 124
        %v458 = vpop.permute.xlu0 %457
        %v460 = vsub.f32 %v451, %v458
        %462 = vrot.lane.b32.xlu0 %v447, 120
        %v463 = vpop.permute.xlu0 %462
        %466 = vrot.lane.b32.xlu0 %v460, 124
        %v467 = vpop.permute.xlu0 %466
        %v469 = vsel %vm433, %v463, %v467
        %471 = vrot.lane.b32.xlu0 %v469, 8
        %v472 = vpop.permute.xlu0 %471
        %vm474 = vcmask 64512
        %v475 = vsel %vm474, %v434, %v472
        %vm476 = vcmask 130048
        %477 = vst.msk [vmem:[%s342] sm:$0xff] %vm476, %v475
        %478 = vrot.lane.b32.xlu0 %v405, 32
        %v479 = vpop.permute.xlu0 %478
        %v481 = vmul.f32 %v403, %v479
        %482 = vrot.lane.b32.xlu0 %v406, 36
        %v483 = vpop.permute.xlu0 %482
        %v485 = vmul.f32 %v403, %v483
        %487 = vrot.lane.b32.xlu0 %v485, 124
        %v488 = vpop.permute.xlu0 %487
        %v490 = vsub.f32 %v481, %v488
        %491 = vrot.lane.b32.xlu0 %v406, 32
        %v492 = vpop.permute.xlu0 %491
        %v494 = vmul.f32 %v403, %v492
        %495 = vrot.lane.b32.xlu0 %v405, 36
        %v496 = vpop.permute.xlu0 %495
        %v498 = vmul.f32 %v403, %v496
        %500 = vrot.lane.b32.xlu0 %v498, 124
        %v501 = vpop.permute.xlu0 %500
        %v503 = vsub.f32 %v494, %v501
        %505 = vrot.lane.b32.xlu0 %v490, 96
        %v506 = vpop.permute.xlu0 %505
        %509 = vrot.lane.b32.xlu0 %v503, 100
        %v510 = vpop.permute.xlu0 %509
        %v512 = vsel %vm433, %v506, %v510
        %513 = vst.msk [vmem:[%s349] sm:$0xff] %vm474, %v512
        %515 = vrot.lane.b32.xlu0 %v403, 80
        %v516 = vpop.permute.xlu0 %515
        %518 = vst.msk [vmem:[%s356] sm:$0xff] %vm474, %v516
        %519 = vrot.lane.b32.xlu0 %v405, 16
        %v520 = vpop.permute.xlu0 %519
        %v522 = vmul.f32 %v403, %v520
        %523 = vrot.lane.b32.xlu0 %v406, 20
        %v524 = vpop.permute.xlu0 %523
        %v526 = vmul.f32 %v403, %v524
        %528 = vrot.lane.b32.xlu0 %v526, 124
        %v529 = vpop.permute.xlu0 %528
        %v531 = vsub.f32 %v522, %v529
        %532 = vrot.lane.b32.xlu0 %v406, 16
        %v533 = vpop.permute.xlu0 %532
        %v535 = vmul.f32 %v403, %v533
        %536 = vrot.lane.b32.xlu0 %v405, 20
        %v537 = vpop.permute.xlu0 %536
        %v539 = vmul.f32 %v403, %v537
        %541 = vrot.lane.b32.xlu0 %v539, 124
        %v542 = vpop.permute.xlu0 %541
        %v544 = vsub.f32 %v535, %v542
        %546 = vrot.lane.b32.xlu0 %v531, 112
        %v547 = vpop.permute.xlu0 %546
        %550 = vrot.lane.b32.xlu0 %v544, 116
        %v551 = vpop.permute.xlu0 %550
        %v553 = vsel %vm433, %v547, %v551
        %554 = vrot.lane.b32.xlu0 %v405, 24
        %v555 = vpop.permute.xlu0 %554
        %v557 = vmul.f32 %v403, %v555
        %558 = vrot.lane.b32.xlu0 %v406, 28
        %v559 = vpop.permute.xlu0 %558
        %v561 = vmul.f32 %v403, %v559
        %563 = vrot.lane.b32.xlu0 %v561, 124
        %v564 = vpop.permute.xlu0 %563
        %v566 = vsub.f32 %v557, %v564
        %567 = vrot.lane.b32.xlu0 %v406, 24
        %v568 = vpop.permute.xlu0 %567
        %v570 = vmul.f32 %v403, %v568
        %571 = vrot.lane.b32.xlu0 %v405, 28
        %v572 = vpop.permute.xlu0 %571
        %v574 = vmul.f32 %v403, %v572
        %576 = vrot.lane.b32.xlu0 %v574, 124
        %v577 = vpop.permute.xlu0 %576
        %v579 = vsub.f32 %v570, %v577
        %581 = vrot.lane.b32.xlu0 %v566, 104
        %v582 = vpop.permute.xlu0 %581
        %585 = vrot.lane.b32.xlu0 %v579, 108
        %v586 = vpop.permute.xlu0 %585
        %v588 = vsel %vm433, %v582, %v586
        %590 = vrot.lane.b32.xlu0 %v588, 8
        %v591 = vpop.permute.xlu0 %590
        %v593 = vsel %vm474, %v553, %v591
        %s594 = scalar_lea.vmem %s342, 8 [#allocation5]
        %595 = vst.msk [vmem:[%s594] sm:$0xff] %vm476, %v593
        %596 = vrot.lane.b32.xlu0 %v405, 40
        %v597 = vpop.permute.xlu0 %596
        %v599 = vmul.f32 %v403, %v597
        %600 = vrot.lane.b32.xlu0 %v406, 44
        %v601 = vpop.permute.xlu0 %600
        %v603 = vmul.f32 %v403, %v601
        %605 = vrot.lane.b32.xlu0 %v603, 124
        %v606 = vpop.permute.xlu0 %605
        %v608 = vsub.f32 %v599, %v606
        %609 = vrot.lane.b32.xlu0 %v406, 40
        %v610 = vpop.permute.xlu0 %609
        %v612 = vmul.f32 %v403, %v610
        %613 = vrot.lane.b32.xlu0 %v405, 44
        %v614 = vpop.permute.xlu0 %613
        %v616 = vmul.f32 %v403, %v614
        %618 = vrot.lane.b32.xlu0 %v616, 124
        %v619 = vpop.permute.xlu0 %618
        %v621 = vsub.f32 %v612, %v619
        %623 = vrot.lane.b32.xlu0 %v608, 88
        %v624 = vpop.permute.xlu0 %623
        %627 = vrot.lane.b32.xlu0 %v621, 92
        %v628 = vpop.permute.xlu0 %627
        %v630 = vsel %vm433, %v624, %v628
        %s631 = scalar_lea.vmem %s349, 8 [#allocation6]
        %632 = vst.msk [vmem:[%s631] sm:$0xff] %vm474, %v630
        %633 = vrot.lane.b32.xlu0 %v403, 72
        %v634 = vpop.permute.xlu0 %633
        %s636 = scalar_lea.vmem %s356, 8 [#allocation8]
        %637 = vst.msk [vmem:[%s636] sm:$0xff] %vm474, %v634
        %s638 = sand.u32 %s170, 1
        %s639 = scalar_lea.sflag [#allocation4], %s638
        %s640 = sand.u32 %s170, 1
        %s641 = smul.addr %s640, 16
        %s642 = scalar_lea.vmem [#allocation5], %s641
        %s643 = sand.u32 %s26, 1
        %s644 = scalar_lea.sflag [#allocation7], %s643
        %s645 = sand.u32 %s198, 1
        %s646 = smul.addr %s645, 16
        %s647 = scalar_lea.vmem [#allocation6], %s646
        %s648 = sand.u32 %s26, 1
        %s649 = scalar_lea.sflag [#allocation7], %s648
        %s650 = sand.u32 %s226, 1
        %s651 = smul.addr %s650, 16
        %s652 = scalar_lea.vmem [#allocation8], %s651
        // Predicated region
        $region45: #{tpu_custom_call.1} parent=39 // pred_check
          %p653 = pneg %p180
        $region46: #{tpu_custom_call.1} parent=39 // pred_check_branch
          %655 = sbr.rel (%p653) target = $region48
        $region47: #{tpu_custom_call.1} parent=39 // pred_region
          %657 = vsyncadd %s639, 0
          %s658 = sadd.s32 %s31, %s30
          %s659 = smul.addr %s658, 8
          %s660 = scalar_lea.hbm %s5, %s659
          %s661 = sshll.u32 %s642, 4
          %s662 = int_to_ptr.vmem [resolvable:$true] %s661
          %s663 = sshll.u32 %s660, 4
          %s664 = int_to_ptr.hbm [resolvable:$true] %s663
          %669 = dma.vmem_to_hbm [thread:$0]  %s662, 256, %s664, %s639, 128, 256, 8
        $region48: #{tpu_custom_call.1} parent=39 // pred_fallthru
          _
        // Predicated region
        $region49: #{tpu_custom_call.1} parent=39 // pred_check
          %p670 = pneg %p208
        $region50: #{tpu_custom_call.1} parent=39 // pred_check_branch
          %672 = sbr.rel (%p670) target = $region52
        $region51: #{tpu_custom_call.1} parent=39 // pred_region
          %674 = vsyncadd %s644, 0
          %s675 = sadd.s32 %s31, %s30
          %s676 = smul.addr %s675, 8
          %s677 = scalar_lea.hbm %s6, %s676
          %s678 = sshll.u32 %s647, 4
          %s679 = int_to_ptr.vmem [resolvable:$true] %s678
          %s680 = sshll.u32 %s677, 4
          %s681 = int_to_ptr.hbm [resolvable:$true] %s680
          %686 = dma.vmem_to_hbm [thread:$0]  %s679, 256, %s681, %s644, 128, 256, 8
        $region52: #{tpu_custom_call.1} parent=39 // pred_fallthru
          _
        // Predicated region
        $region53: #{tpu_custom_call.1} parent=39 // pred_check
          %p687 = pneg %p236
        $region54: #{tpu_custom_call.1} parent=39 // pred_check_branch
          %689 = sbr.rel (%p687) target = $region56
        $region55: #{tpu_custom_call.1} parent=39 // pred_region
          %691 = vsyncadd %s649, 0
          %s692 = sadd.s32 %s31, %s30
          %s693 = smul.addr %s692, 8
          %s694 = scalar_lea.hbm %s7, %s693
          %s695 = sshll.u32 %s652, 4
          %s696 = int_to_ptr.vmem [resolvable:$true] %s695
          %s697 = sshll.u32 %s694, 4
          %s698 = int_to_ptr.hbm [resolvable:$true] %s697
          %703 = dma.vmem_to_hbm [thread:$0]  %s696, 256, %s698, %s649, 128, 256, 8
        $region56: #{tpu_custom_call.1} parent=39 // pred_fallthru
          _
      $region40: #{tpu_custom_call.1} parent=5 // pred_fallthru
        _
      %p704 = scmp.le.s32.totalorder 2, %s21
      // Predicated region
      $region57: #{tpu_custom_call.1} parent=5 // pred_check
        %p705 = pneg %p704
      $region58: #{tpu_custom_call.1} parent=5 // pred_check_branch
        %707 = sbr.rel (%p705) target = $region60
      $region59: #{tpu_custom_call.1} parent=5 // pred_region
        %s708 = ssub.s32 %s21, 2
        // Predicated region
        $region61: #{tpu_custom_call.1} parent=59 // pred_check
          %p709 = pneg %p186
        $region62: #{tpu_custom_call.1} parent=59 // pred_check_branch
          %711 = sbr.rel (%p709) target = $region64
        $region63: #{tpu_custom_call.1} parent=59 // pred_region
          %s712 = sand.u32 %s171, 1
          %s713 = scalar_lea.sflag [#allocation4], %s712
          %s714 = sand.u32 %s171, 1
          %s715 = smul.addr %s714, 16
          %s716 = scalar_lea.vmem [#allocation5], %s715
          %718 = dma.done %s713, 256
        $region64: #{tpu_custom_call.1} parent=59 // pred_fallthru
          _
        // Predicated region
        $region65: #{tpu_custom_call.1} parent=59 // pred_check
          %p719 = pneg %p214
        $region66: #{tpu_custom_call.1} parent=59 // pred_check_branch
          %721 = sbr.rel (%p719) target = $region68
        $region67: #{tpu_custom_call.1} parent=59 // pred_region
          %s722 = sand.u32 %s27, 1
          %s723 = scalar_lea.sflag [#allocation7], %s722
          %s724 = sand.u32 %s199, 1
          %s725 = smul.addr %s724, 16
          %s726 = scalar_lea.vmem [#allocation6], %s725
          %728 = dma.done %s723, 256
        $region68: #{tpu_custom_call.1} parent=59 // pred_fallthru
          _
        // Predicated region
        $region69: #{tpu_custom_call.1} parent=59 // pred_check
          %p729 = pneg %p242
        $region70: #{tpu_custom_call.1} parent=59 // pred_check_branch
          %731 = sbr.rel (%p729) target = $region72
        $region71: #{tpu_custom_call.1} parent=59 // pred_region
          %s732 = sand.u32 %s27, 1
          %s733 = scalar_lea.sflag [#allocation7], %s732
          %s734 = sand.u32 %s227, 1
          %s735 = smul.addr %s734, 16
          %s736 = scalar_lea.vmem [#allocation8], %s735
          %738 = dma.done %s733, 256
        $region72: #{tpu_custom_call.1} parent=59 // pred_fallthru
          _
      $region60: #{tpu_custom_call.1} parent=5 // pred_fallthru
        _
    $region6: #{tpu_custom_call.1} parent=1 // loop_footer
      %s25 = sadd.s32 1, %s21
    $region7: #{tpu_custom_call.1} parent=1 // loop_footer_branch
      %20 = sbr.rel target = $region3
    $region8: #{tpu_custom_call.1} parent=1 // loop_exit
      _
    %739 = vsyncpa [#allocation3], 1
    %s740 = scalar_lea.sflag [#allocation3], 1
    %741 = vsyncpa %s740, 1
    %742 = vsyncpa [#allocation4], 1
    %s743 = scalar_lea.sflag [#allocation4], 1
    %744 = vsyncpa %s743, 1
    %745 = vsyncpa [#allocation7], 1
    %s746 = scalar_lea.sflag [#allocation7], 1
    %747 = vsyncpa %s746, 1

</llo_original>
